<compile_context>
chip_gen: v7x
topology: tpu7x:2x2x1
jax: 0.10.0
libtpu: 0.0.40
codegen_flags: <defaults>
</compile_context>

<pallas_src>
import functools

import jax
import jax.numpy as jnp
from jax.experimental import pallas as pl
from jax.experimental.pallas import tpu as pltpu


# ----------------------------------------------------------------------------
# small in-kernel math helpers
# ----------------------------------------------------------------------------

_SQRT1_2 = 0.7071067811865476


def _erf(x):
    # Abramowitz & Stegun 7.1.26 rational approximation, |err| < 1.5e-7.
    t = 1.0 / (1.0 + 0.3275911 * jnp.abs(x))
    poly = t * (0.254829592 + t * (-0.284496736 + t * (1.421413741
                + t * (-1.453152027 + t * 1.061405429))))
    y = 1.0 - poly * jnp.exp(-x * x)
    return jnp.where(x >= 0, y, -y)


def _gelu_exact(x):
    return 0.5 * x * (1.0 + _erf(x * _SQRT1_2))


def _ln(x, g, b, eps=1e-5):
    mu = jnp.mean(x, axis=-1, keepdims=True)
    var = jnp.mean(jnp.square(x - mu), axis=-1, keepdims=True)
    return (x - mu) * jax.lax.rsqrt(var + eps) * g + b


def bn_fold(bn, eps=1e-5):
    scale = bn["gamma"] / jnp.sqrt(bn["var"] + eps)
    shift = bn["beta"] - bn["mean"] * scale
    return scale, shift


# ----------------------------------------------------------------------------
# generic fused linear kernel (bias + activation, cdiv M tiling)
# ----------------------------------------------------------------------------

def _linear_kernel(x_ref, w_ref, b_ref, o_ref, *, activation):
    acc = jnp.dot(x_ref[...].astype(jnp.bfloat16), w_ref[...],
                  preferred_element_type=jnp.float32)
    acc = acc + b_ref[...]
    if activation == "relu":
        acc = jnp.maximum(acc, 0.0)
    o_ref[...] = acc.astype(o_ref.dtype)


def pallas_linear(x, w, bias, activation="none", tile_m=512):
    M, K = x.shape
    N = w.shape[1]
    w_bf = w.astype(jnp.bfloat16)
    b2 = bias.reshape(1, N).astype(jnp.float32)
    kern = functools.partial(_linear_kernel, activation=activation)
    if M <= tile_m:
        return pl.pallas_call(
            kern, out_shape=jax.ShapeDtypeStruct((M, N), x.dtype))(x, w_bf, b2)
    return pl.pallas_call(
        kern,
        out_shape=jax.ShapeDtypeStruct((M, N), x.dtype),
        grid=(pl.cdiv(M, tile_m),),
        in_specs=[pl.BlockSpec((tile_m, K), lambda i: (i, 0)),
                  pl.BlockSpec((K, N), lambda i: (0, 0)),
                  pl.BlockSpec((1, N), lambda i: (0, 0))],
        out_specs=pl.BlockSpec((tile_m, N), lambda i: (i, 0)),
        compiler_params=pltpu.CompilerParams(
            dimension_semantics=("parallel",)),
    )(x, w_bf, b2)


# ----------------------------------------------------------------------------
# fully fused CrossViewAttention kernel (one grid step per batch element):
#   img_embed + l2norm, key = img_embed + BN/ReLU/1x1(feature),
#   val = BN/ReLU/1x1(feature), bev_embed + l2norm, query = bev_embed + x,
#   LN -> fused Q/K/V -> per-head softmax attention -> proj -> +skip ->
#   prenorm -> MLP(GELU) -> +res -> postnorm.
# ----------------------------------------------------------------------------

# indices into the packed (N_VEC, VW) vector slab
V_QG, V_QB, V_KG, V_KB, V_VG, V_VB = 0, 1, 2, 3, 4, 5
V_QBIAS, V_KBIAS, V_VBIAS = 6, 7, 8
V_PROJ_B = 9
V_PRE_G, V_PRE_B = 10, 11
V_MLP_B1, V_MLP_B2 = 12, 13
V_POST_G, V_POST_B = 14, 15
V_BEV_B = 16
V_FP_S, V_FP_T, V_FL_S, V_FL_T = 17, 18, 19, 20
N_VEC = 21


def _cva_attn_kernel(x_ref, d_ref, feat_ref, wcl_ref,
                     w_img_ref, w_fp_ref, w_fl_ref, w_bev_ref,
                     wq_ref, wk_ref, wv_ref, wp_ref, w1_ref, w2_ref,
                     vec_ref, o_ref, *, heads, dh, dim, cf, scale, use_skip):
    def vec(i, w):
        return vec_ref[i:i + 1, :w]

    bf = jnp.bfloat16
    hd = heads * dh

    x = x_ref[...].astype(jnp.float32)                 # (Q, dim)
    d = d_ref[...].astype(bf)                          # (nK, 4)
    feat = feat_ref[...].astype(jnp.float32)           # (nK, cf)

    # --- image / feature embeddings (key & value) ---
    img = jnp.dot(d, w_img_ref[...], preferred_element_type=jnp.float32)
    img = img / (jnp.sqrt(jnp.sum(img * img, axis=-1, keepdims=True)) + 1e-7)
    fp = jnp.maximum(feat * vec(V_FP_S, cf) + vec(V_FP_T, cf), 0.0)
    key = img + jnp.dot(fp.astype(bf), w_fp_ref[...],
                        preferred_element_type=jnp.float32)
    fl = jnp.maximum(feat * vec(V_FL_S, cf) + vec(V_FL_T, cf), 0.0)
    val = jnp.dot(fl.astype(bf), w_fl_ref[...],
                  preferred_element_type=jnp.float32)

    # --- BEV positional embedding + query ---
    bev = jnp.dot(wcl_ref[...].astype(bf), w_bev_ref[...],
                  preferred_element_type=jnp.float32) + vec(V_BEV_B, dim)
    bev = bev / (jnp.sqrt(jnp.sum(bev * bev, axis=-1, keepdims=True)) + 1e-7)
    q_in = bev + x

    # --- cross attention (heads fused in the projections) ---
    qn = _ln(q_in, vec(V_QG, dim), vec(V_QB, dim))
    kn = _ln(key, vec(V_KG, dim), vec(V_KB, dim))
    vn = _ln(val, vec(V_VG, dim), vec(V_VB, dim))

    qf = jnp.dot(qn.astype(bf), wq_ref[...],
                 preferred_element_type=jnp.float32) + vec(V_QBIAS, hd)
    kf = jnp.dot(kn.astype(bf), wk_ref[...],
                 preferred_element_type=jnp.float32) + vec(V_KBIAS, hd)
    vf = jnp.dot(vn.astype(bf), wv_ref[...],
                 preferred_element_type=jnp.float32) + vec(V_VBIAS, hd)

    outs = []
    for h in range(heads):
        sl = slice(h * dh, (h + 1) * dh)
        s = scale * jax.lax.dot_general(
            qf[:, sl].astype(bf), kf[:, sl].astype(bf),
            (((1,), (1,)), ((), ())), preferred_element_type=jnp.float32)
        m = jnp.max(s, axis=-1, keepdims=True)
        e = jnp.exp(s - m)
        att = e * pl.reciprocal(jnp.sum(e, axis=-1, keepdims=True), approx=True)
        outs.append(jnp.dot(att.astype(bf), vf[:, sl].astype(bf),
                            preferred_element_type=jnp.float32))
    a = jnp.concatenate(outs, axis=-1)                 # (Q, heads*dh)

    z = jnp.dot(a.astype(bf), wp_ref[...],
                preferred_element_type=jnp.float32) + vec(V_PROJ_B, dim)
    if use_skip:
        z = z + x
    z = _ln(z, vec(V_PRE_G, dim), vec(V_PRE_B, dim))
    h1 = jnp.dot(z.astype(bf), w1_ref[...],
                 preferred_element_type=jnp.float32) + vec(V_MLP_B1, 2 * dim)
    h1 = _gelu_exact(h1)
    z = z + jnp.dot(h1.astype(bf), w2_ref[...],
                    preferred_element_type=jnp.float32) + vec(V_MLP_B2, dim)
    z = _ln(z, vec(V_POST_G, dim), vec(V_POST_B, dim))
    o_ref[...] = z.astype(o_ref.dtype)


def pallas_cross_view_attention(p, x2d, d_cl, feat_cl, w_cl, cfg, b):
    dim, heads, dh = cfg["dim"], cfg["heads"], cfg["dim_head"]
    hd = heads * dh
    Q = x2d.shape[0] // b
    nK = feat_cl.shape[0] // b
    cf = feat_cl.shape[1]
    scale = dh ** -0.5
    ap = p["attn"]
    bf = jnp.bfloat16

    fp_s, fp_t = bn_fold(p["feature_proj_bn"])
    fl_s, fl_t = bn_fold(p["feature_linear_bn"])

    # pack every small vector into one slab (single DMA descriptor / tile)
    VW = max(dim, hd, 2 * dim, cf)
    vecs = jnp.zeros((N_VEC, VW), jnp.float32)
    for i, v in [
        (V_QG, ap["q_ln_g"]), (V_QB, ap["q_ln_b"]),
        (V_KG, ap["k_ln_g"]), (V_KB, ap["k_ln_b"]),
        (V_VG, ap["v_ln_g"]), (V_VB, ap["v_ln_b"]),
        (V_QBIAS, ap["q_b"]), (V_KBIAS, ap["k_b"]), (V_VBIAS, ap["v_b"]),
        (V_PROJ_B, ap["proj_b"]),
        (V_PRE_G, ap["prenorm_g"]), (V_PRE_B, ap["prenorm_b"]),
        (V_MLP_B1, ap["mlp_b1"]), (V_MLP_B2, ap["mlp_b2"]),
        (V_POST_G, ap["postnorm_g"]), (V_POST_B, ap["postnorm_b"]),
        (V_BEV_B, p["bev_embed_b"]),
        (V_FP_S, fp_s), (V_FP_T, fp_t), (V_FL_S, fl_s), (V_FL_T, fl_t),
    ]:
        vecs = vecs.at[i, :v.shape[0]].set(v)

    consts = [
        w_cl,
        p["img_embed_w"].astype(bf), p["feature_proj_w"].astype(bf),
        p["feature_linear_w"].astype(bf), p["bev_embed_w"].astype(bf),
        ap["q_w"].astype(bf), ap["k_w"].astype(bf), ap["v_w"].astype(bf),
        ap["proj_w"].astype(bf), ap["mlp_w1"].astype(bf), ap["mlp_w2"].astype(bf),
        vecs,
    ]

    def _rows(rows, cols):
        return pl.BlockSpec((rows, cols), lambda i: (i, 0))

    def _const(a):
        nd = a.ndim
        return pl.BlockSpec(a.shape, lambda i, _nd=nd: (0,) * _nd)

    in_specs = ([_rows(Q, dim), _rows(nK, 4), _rows(nK, cf)]
                + [_const(a) for a in consts])

    kern = functools.partial(_cva_attn_kernel, heads=heads, dh=dh, dim=dim,
                             cf=cf, scale=scale, use_skip=cfg["skip"])
    # TODO(synk): weight BlockSpecs could use pipeline_mode=pl.Buffered(1) to
    # halve their VMEM footprint on v5e's 16 MiB scoped default.
    return pl.pallas_call(
        kern,
        out_shape=jax.ShapeDtypeStruct((b * Q, dim), x2d.dtype),
        grid=(b,),
        in_specs=in_specs,
        out_specs=_rows(Q, dim),
        compiler_params=pltpu.CompilerParams(
            dimension_semantics=("parallel",)),
    )(x2d, d_cl, feat_cl, *consts)


# ----------------------------------------------------------------------------
# fully fused ResNet Bottleneck kernel (conv1x1+BN+ReLU, conv3x3+BN+ReLU,
# conv1x1+BN, +identity, ReLU).  3x3 conv = 9 XLU sublane rolls of the in-vreg
# activation + iota boundary mask; no scratch, no mask DMA, no im2col.
# ----------------------------------------------------------------------------

def _bottleneck_kernel(x_ref, w1_ref, w2_ref, w3_ref, st_ref, o_ref, *, H, W):
    bf = jnp.bfloat16
    x = x_ref[...].astype(jnp.float32)                 # (M, C)
    M, C = x.shape
    planes = w1_ref.shape[1]
    HW = H * W

    s1, t1 = st_ref[0:1, :planes], st_ref[1:2, :planes]
    s2, t2 = st_ref[2:3, :planes], st_ref[3:4, :planes]
    s3, t3 = st_ref[4:5, :C], st_ref[5:6, :C]

    y = jnp.dot(x.astype(bf), w1_ref[...], preferred_element_type=jnp.float32)
    y = jnp.maximum(y * s1 + t1, 0.0)                  # (M, planes)

    # per-row (row, col) inside its own image; mask also kills cross-image
    # leakage from the circular rolls.
    r = jax.lax.broadcasted_iota(jnp.int32, (M, 1), 0) % HW
    ii = r // W
    jj = r % W

    acc = jnp.zeros((M, planes), jnp.float32)
    for t in range(9):
        di, dj = t // 3 - 1, t % 3 - 1
        shift = di * W + dj
        shifted = y if shift == 0 else pltpu.roll(y, (-shift) % M, axis=0)
        valid = ((ii + di >= 0) & (ii + di < H)
                 & (jj + dj >= 0) & (jj + dj < W))
        patch = (shifted * valid.astype(jnp.float32)).astype(bf)
        acc = acc + jnp.dot(patch, w2_ref[t],
                            preferred_element_type=jnp.float32)

    y2 = jnp.maximum(acc * s2 + t2, 0.0)
    y3 = jnp.dot(y2.astype(bf), w3_ref[...],
                 preferred_element_type=jnp.float32) * s3 + t3
    o_ref[...] = jnp.maximum(y3 + x, 0.0).astype(o_ref.dtype)


def _pick_group(b, HW, C, planes):
    # group whole images per grid step: big matmul M, bounded VMEM
    bytes_per_img = HW * (C + 2 * planes) * 4
    budget = 6 * 1024 * 1024
    if b * bytes_per_img <= budget:
        return b
    cands = [g for g in range(b, 0, -1)
             if b % g == 0 and g * bytes_per_img <= budget
             and (g * HW) % 8 == 0]
    return cands[0] if cands else b


def pallas_bottleneck(p, x2d, H, W):
    M, C = x2d.shape
    HW = H * W
    b = M // HW
    planes = p["conv1_w"].shape[1]
    bf = jnp.bfloat16

    s1, t1 = bn_fold(p["bn1"])
    s2, t2 = bn_fold(p["bn2"])
    s3, t3 = bn_fold(p["bn3"])
    VW = max(planes, C)
    st = jnp.zeros((6, VW), jnp.float32)
    for i, v in enumerate([s1, t1, s2, t2, s3, t3]):
        st = st.at[i, :v.shape[0]].set(v)

    w1 = p["conv1_w"].astype(bf)
    w2 = p["conv2_w"].reshape(9, planes, planes).astype(bf)
    w3 = p["conv3_w"].astype(bf)

    g = _pick_group(b, HW, C, planes)
    rows = g * HW
    in_specs = [pl.BlockSpec((rows, C), lambda i: (i, 0)),
                pl.BlockSpec(w1.shape, lambda i: (0, 0)),
                pl.BlockSpec(w2.shape, lambda i: (0, 0, 0)),
                pl.BlockSpec(w3.shape, lambda i: (0, 0)),
                pl.BlockSpec(st.shape, lambda i: (0, 0))]

    return pl.pallas_call(
        functools.partial(_bottleneck_kernel, H=H, W=W),
        out_shape=jax.ShapeDtypeStruct((M, C), x2d.dtype),
        grid=(M // rows,),
        in_specs=in_specs,
        out_specs=pl.BlockSpec((rows, C), lambda i: (i, 0)),
        compiler_params=pltpu.CompilerParams(
            dimension_semantics=("parallel",)),
    )(x2d, w1, w2, w3, st)


# ----------------------------------------------------------------------------
# plain-JAX glue (layout plumbing, camera geometry, pooling)
# ----------------------------------------------------------------------------

def normalize_image(x):  # x: (bn, H, W, 3) channels-last
    mean = jnp.array([0.485, 0.456, 0.406], jnp.float32)
    std = jnp.array([0.229, 0.224, 0.225], jnp.float32)
    return (x - mean) / std


def generate_grid(h, w):
    xs = jnp.linspace(0.0, 1.0, w)
    ys = jnp.linspace(0.0, 1.0, h)
    xg, yg = jnp.meshgrid(xs, ys, indexing="xy")
    grid = jnp.stack([xg, yg, jnp.ones_like(xg)], axis=0)       # (3, h, w)
    return grid[None]                                           # (1, 3, h, w)


def avg_pool_nhwc(x, k):
    b, h, w, c = x.shape
    return x.reshape(b, h // k, k, w // k, k, c).mean(axis=(2, 4))


# ----------------------------------------------------------------------------
# module forwards
# ----------------------------------------------------------------------------

def backbone_forward(p, x_nhwc):
    """# TODO(synk): the reference Encoder takes an arbitrary injected backbone;
    this is a deterministic 2-stage synthetic stand-in (avgpool + 1x1 conv + ReLU)."""
    bn_ = x_nhwc.shape[0]
    f1 = avg_pool_nhwc(x_nhwc, 4)                               # (bn, 8, 8, 3)
    h1, w1, c0 = f1.shape[1:]
    f1 = pallas_linear(f1.reshape(-1, c0), p["w1"], p["b1"], activation="relu")
    f1 = f1.reshape(bn_, h1, w1, -1)                            # (bn, 8, 8, 16)

    f2 = avg_pool_nhwc(f1, 2)                                   # (bn, 4, 4, 16)
    h2, w2, c1 = f2.shape[1:]
    f2 = pallas_linear(f2.reshape(-1, c1), p["w2"], p["b2"], activation="relu")
    f2 = f2.reshape(bn_, h2, w2, -1)                            # (bn, 4, 4, 32)
    return [f1, f2]


def cross_view_attention(p, x2d, bev_grid, feat_nhwc, I_inv, E_inv, cfg,
                         b, n, Hb, Wb):
    bn_, h, w, cf = feat_nhwc.shape
    Q = Hb * Wb

    # camera-ray directions (tiny geometry, plain JAX)
    pixel = generate_grid(h, w)[None]                           # (1,1,3,h,w)
    pixel = pixel * jnp.array(
        [cfg["image_width"], cfg["image_height"], 1.0],
        jnp.float32).reshape(1, 1, 3, 1, 1)
    pixel_flat = pixel.reshape(1, 1, 3, h * w)
    cam = jnp.matmul(I_inv, pixel_flat)                         # (b, n, 3, hw)
    cam = jnp.pad(cam, ((0, 0), (0, 0), (0, 1), (0, 0)), constant_values=1.0)
    d = jnp.matmul(E_inv, cam)                                  # (b, n, 4, hw)
    d_cl = jnp.transpose(d, (0, 1, 3, 2)).reshape(-1, 4)        # (b*n*h*w, 4)

    w_cl = bev_grid[:2].reshape(2, Q).T                         # (Q, 2)
    feat_cl = feat_nhwc.reshape(-1, cf)                         # channels-last

    return pallas_cross_view_attention(p, x2d, d_cl, feat_cl, w_cl, cfg, b)


def encoder_forward(params, batch, cfg):
    image = batch["image"]                                      # (b, n, 3, H, W)
    b, n = image.shape[:2]
    img = image.reshape((b * n,) + image.shape[2:])
    img = jnp.transpose(img, (0, 2, 3, 1))                      # NHWC interface transpose
    I_inv = jnp.linalg.inv(batch["intrinsics"])                 # (b, n, 3, 3)
    E_inv = jnp.linalg.inv(batch["extrinsics"])                 # (b, n, 4, 4)

    feats = backbone_forward(params["backbone"], normalize_image(img))
    feats = list(reversed(feats))                               # deepest scale first

    prior = params["bev"]["learned"]                            # (dim, Hb, Wb)
    dim, Hb, Wb = prior.shape
    Q = Hb * Wb
    x = jnp.broadcast_to(prior.reshape(dim, Q).T[None],
                         (b, Q, dim)).reshape(b * Q, dim)       # channels-last BEV state

    for cv_p, layer_p, feat in zip(params["cross_views"], params["layers"], feats):
        x = cross_view_attention(cv_p, x, params["bev"]["grid"], feat,
                                 I_inv, E_inv, cfg, b, n, Hb, Wb)
        for blk in layer_p:
            x = pallas_bottleneck(blk, x, Hb, Wb)

    out = x.reshape(b, Hb, Wb, dim)
    return jnp.transpose(out, (0, 3, 1, 2))                     # public NCHW


# ----------------------------------------------------------------------------
# deterministic parameter construction
# ----------------------------------------------------------------------------

def init_params(key, cfg, feat_dims, bev_cfg, middle):
    dim, heads, dh = cfg["dim"], cfg["heads"], cfg["dim_head"]
    keys = iter(jax.random.split(key, 512))

    def nrm(shape, s=0.05):
        return s * jax.random.normal(next(keys), shape, jnp.float32)

    def bn_params(c):
        return {"gamma": 1.0 + nrm((c,)),
                "beta": nrm((c,)),
                "mean": nrm((c,)),
                "var": 1.0 + 0.1 * jnp.abs(
                    jax.random.normal(next(keys), (c,), jnp.float32))}

    hb = bev_cfg["bev_height"] // (2 ** len(bev_cfg["decoder_blocks"]))
    wb = bev_cfg["bev_width"] // (2 ** len(bev_cfg["decoder_blocks"]))
    grid = generate_grid(hb, wb)[0]
    grid = grid * jnp.array([bev_cfg["bev_width"], bev_cfg["bev_height"], 1.0],
                            jnp.float32).reshape(3, 1, 1)
    sh = bev_cfg["bev_height"] / bev_cfg["h_meters"]
    sw = bev_cfg["bev_width"] / bev_cfg["w_meters"]
    V = jnp.array([[0.0, -sw, bev_cfg["bev_width"] / 2.0],
                   [-sh, 0.0, bev_cfg["bev_height"] * bev_cfg["offset"]
                    + bev_cfg["bev_height"] / 2.0],
                   [0.0, 0.0, 1.0]], jnp.float32)
    grid = (jnp.linalg.inv(V) @ grid.reshape(3, hb * wb)).reshape(3, hb, wb)
    bev = {"grid": grid,
           "learned": bev_cfg["sigma"] * jax.random.normal(
               next(keys), (dim, hb, wb), jnp.float32)}

    backbone = {"w1": nrm((3, 16), 0.2), "b1": nrm((16,)),
                "w2": nrm((16, 32), 0.2), "b2": nrm((32,))}

    def attn_params():
        return {
            "q_ln_g": 1.0 + nrm((dim,)), "q_ln_b": nrm((dim,)),
            "k_ln_g": 1.0 + nrm((dim,)), "k_ln_b": nrm((dim,)),
            "v_ln_g": 1.0 + nrm((dim,)), "v_ln_b": nrm((dim,)),
            "q_w": nrm((dim, heads * dh), 0.1), "q_b": nrm((heads * dh,)),
            "k_w": nrm((dim, heads * dh), 0.1), "k_b": nrm((heads * dh,)),
            "v_w": nrm((dim, heads * dh), 0.1), "v_b": nrm((heads * dh,)),
            "proj_w": nrm((heads * dh, dim), 0.1), "proj_b": nrm((dim,)),
            "prenorm_g": 1.0 + nrm((dim,)), "prenorm_b": nrm((dim,)),
            "mlp_w1": nrm((dim, 2 * dim), 0.1), "mlp_b1": nrm((2 * dim,)),
            "mlp_w2": nrm((2 * dim, dim), 0.1), "mlp_b2": nrm((dim,)),
            "postnorm_g": 1.0 + nrm((dim,)), "postnorm_b": nrm((dim,)),
        }

    cross_views, layers = [], []
    planes = dim // 4
    for feat_dim, num_layers in zip(feat_dims, middle):
        cross_views.append({
            "img_embed_w": nrm((4, dim), 0.1),
            "bev_embed_w": nrm((2, dim), 0.1), "bev_embed_b": nrm((dim,)),
            "feature_proj_bn": bn_params(feat_dim),
            "feature_proj_w": nrm((feat_dim, dim), 0.1),
            "feature_linear_bn": bn_params(feat_dim),
            "feature_linear_w": nrm((feat_dim, dim), 0.1),
            "attn": attn_params(),
        })
        blocks = []
        for _ in range(num_layers):
            blocks.append({
                "conv1_w": nrm((dim, planes), 0.1), "bn1": bn_params(planes),
                "conv2_w": nrm((9 * planes, planes), 0.1), "bn2": bn_params(planes),
                "conv3_w": nrm((planes, dim), 0.1), "bn3": bn_params(dim),
            })
        layers.append(blocks)

    return {"bev": bev, "backbone": backbone,
            "cross_views": cross_views, "layers": layers}


# ----------------------------------------------------------------------------
# main
# ----------------------------------------------------------------------------

if __name__ == "__main__":
    cfg = dict(dim=32, heads=4, dim_head=8, qkv_bias=True,
               image_height=32, image_width=32, skip=True)
    bev_cfg = dict(sigma=1.0, bev_height=16, bev_width=16,
                   h_meters=100.0, w_meters=100.0, offset=0.0,
                   decoder_blocks=[1])
    middle = [1, 1]
    # synthetic backbone outputs (NHWC): [(bn,8,8,16), (bn,4,4,32)] -> reversed dims:
    feat_dims = [32, 16]

    key = jax.random.PRNGKey(0)
    k_param, k_img, k_ext = jax.random.split(key, 3)

    b, n = 2, 2
    image = jax.random.uniform(k_img, (b, n, 3, 32, 32), jnp.float32)

    intrinsics = jnp.broadcast_to(
        jnp.array([[20.0, 0.0, 16.0],
                   [0.0, 20.0, 16.0],
                   [0.0, 0.0, 1.0]], jnp.float32), (b, n, 3, 3))
    trans = 0.5 * jax.random.normal(k_ext, (b, n, 3), jnp.float32)
    extrinsics = jnp.broadcast_to(jnp.eye(4, dtype=jnp.float32), (b, n, 4, 4))
    extrinsics = extrinsics.at[..., :3, 3].set(trans)

    batch = {"image": image, "intrinsics": intrinsics, "extrinsics": extrinsics}
    params = init_params(k_param, cfg, feat_dims, bev_cfg, middle)

    out = encoder_forward(params, batch, cfg)
    jax.block_until_ready(out)
    assert out.shape == (b, cfg["dim"], 8, 8), out.shape
    assert jnp.all(jnp.isfinite(out))
    print("KERNEL_OK")
</pallas_src>

<mosaic_0001>
module attributes {stable_mosaic.version = 11 : i64} {
  func.func @_linear_kernel(%arg0: memref<256x3xf32, #tpu.memory_space<vmem>>, %arg1: memref<3x16xbf16, #tpu.memory_space<vmem>>, %arg2: memref<1x16xf32, #tpu.memory_space<vmem>>, %arg3: memref<256x16xf32, #tpu.memory_space<vmem>>) attributes {dimension_semantics = [], scalar_prefetch = 0 : i64, scratch_operands = 0 : i64, tpu.core_type = #tpu.core_type<tc>} {
    %c0 = arith.constant 0 : index
    %c0_0 = arith.constant 0 : index
    %0 = vector.load %arg0[%c0, %c0_0] : memref<256x3xf32, #tpu.memory_space<vmem>>, vector<256x3xf32>
    %1 = arith.truncf %0 : vector<256x3xf32> to vector<256x3xbf16>
    %c0_1 = arith.constant 0 : index
    %c0_2 = arith.constant 0 : index
    %2 = vector.load %arg1[%c0_1, %c0_2] : memref<3x16xbf16, #tpu.memory_space<vmem>>, vector<3x16xbf16>
    %cst = arith.constant dense<0.000000e+00> : vector<256x16xf32>
    %3 = tpu.matmul %1, %2, %cst {dimension_numbers = #tpu.dot_dimension_numbers<[1], [0], [0], [1], [0, 0, 1, 1], [], []>} : vector<256x3xbf16>, vector<3x16xbf16>, vector<256x16xf32> -> vector<256x16xf32>
    %c0_3 = arith.constant 0 : index
    %c0_4 = arith.constant 0 : index
    %4 = vector.load %arg2[%c0_3, %c0_4] : memref<1x16xf32, #tpu.memory_space<vmem>>, vector<1x16xf32>
    %5 = vector.broadcast %4 : vector<1x16xf32> to vector<256x16xf32>
    %6 = arith.addf %3, %5 : vector<256x16xf32>
    %cst_5 = arith.constant 0.000000e+00 : f32
    %7 = vector.broadcast %cst_5 : f32 to vector<256x16xf32>
    %8 = arith.maximumf %6, %7 : vector<256x16xf32>
    %c0_6 = arith.constant 0 : index
    %c0_7 = arith.constant 0 : index
    %9 = vector.load %arg3[%c0_6, %c0_7] : memref<256x16xf32, #tpu.memory_space<vmem>>, vector<256x16xf32>
    tpu.vector_store %arg3[%c0_6, %c0_7], %8 {strides = array<i32>} : memref<256x16xf32, #tpu.memory_space<vmem>>, vector<256x16xf32>,
    return
  }
}

</mosaic_0001>

<llo_original>
// kernel: tpu_custom_call.1
$region0: #{tpu_custom_call.1}
  #allocation0 [shape = 'u32[]', space=smem, size = 0x4, offset = 0x4, fixed_abs, tag = 'smem constant byte address 0x4 - core index']
  #allocation1 [shape = 'u32[144,128]{1,0:T(1,128)}', space=vmem, size = 0x12000, scoped, tag = 'internal scratch']
  %s0 = inlined_call_operand.vmem [shape: f32[256,3], index: 0, kind: input, shape index: {}]
  %s1 = inlined_call_operand.vmem [shape: bf16[3,16], index: 1, kind: input, shape index: {}]
  %s2 = inlined_call_operand.vmem [shape: f32[1,16], index: 2, kind: input, shape index: {}]
  %s3 = inlined_call_operand.vmem [shape: f32[256,16], index: 3, kind: output, shape index: {}]
  %s4 = sld [smem:[#allocation0]]
  $region22: #{tpu_custom_call.1} parent=0
    _
  %s6 = ssub.s32 1, %s4
  %s7 = scalar_select 0, %s6, %s4
  // Predicated region
  $region2: #{tpu_custom_call.1} parent=0 // pred_check
    _
  $region3: #{tpu_custom_call.1} parent=0 // pred_check_branch
    %9 = sbr.rel (0) target = $region5
  $region4: #{tpu_custom_call.1} parent=0 // pred_region
    _
  $region5: #{tpu_custom_call.1} parent=0 // pred_fallthru
    _
  // Predicated region
  $region6: #{tpu_custom_call.1} parent=0 // pred_check
    _
  $region7: #{tpu_custom_call.1} parent=0 // pred_check_branch
    %11 = sbr.rel (0) target = $region9
  $region8: #{tpu_custom_call.1} parent=0 // pred_region
    _
  $region9: #{tpu_custom_call.1} parent=0 // pred_fallthru
    _
  // Predicated region
  $region10: #{tpu_custom_call.1} parent=0 // pred_check
    _
  $region11: #{tpu_custom_call.1} parent=0 // pred_check_branch
    %13 = sbr.rel (0) target = $region13
  $region12: #{tpu_custom_call.1} parent=0 // pred_region
    _
  $region13: #{tpu_custom_call.1} parent=0 // pred_fallthru
    _
  %v15 = vld [vmem:[%s0] sm:$0xff]
  %v16 = vld [vmem:[%s0 + $0x8] sm:$0xff]
  %v17 = vld [vmem:[%s0 + $0x10] sm:$0xff]
  %v18 = vld [vmem:[%s0 + $0x18] sm:$0xff]
  %v19 = vld [vmem:[%s0 + $0x20] sm:$0xff]
  %v20 = vld [vmem:[%s0 + $0x28] sm:$0xff]
  %v21 = vld [vmem:[%s0 + $0x30] sm:$0xff]
  %v22 = vld [vmem:[%s0 + $0x38] sm:$0xff]
  %v23 = vld [vmem:[%s0 + $0x40] sm:$0xff]
  %v24 = vld [vmem:[%s0 + $0x48] sm:$0xff]
  %v25 = vld [vmem:[%s0 + $0x50] sm:$0xff]
  %v26 = vld [vmem:[%s0 + $0x58] sm:$0xff]
  %v27 = vld [vmem:[%s0 + $0x60] sm:$0xff]
  %v28 = vld [vmem:[%s0 + $0x68] sm:$0xff]
  %v29 = vld [vmem:[%s0 + $0x70] sm:$0xff]
  %v30 = vld [vmem:[%s0 + $0x78] sm:$0xff]
  %v31 = vld [vmem:[%s0 + $0x80] sm:$0xff]
  %v32 = vld [vmem:[%s0 + $0x88] sm:$0xff]
  %v33 = vld [vmem:[%s0 + $0x90] sm:$0xff]
  %v34 = vld [vmem:[%s0 + $0x98] sm:$0xff]
  %v35 = vld [vmem:[%s0 + $0xa0] sm:$0xff]
  %v36 = vld [vmem:[%s0 + $0xa8] sm:$0xff]
  %v37 = vld [vmem:[%s0 + $0xb0] sm:$0xff]
  %v38 = vld [vmem:[%s0 + $0xb8] sm:$0xff]
  %v39 = vld [vmem:[%s0 + $0xc0] sm:$0xff]
  %v40 = vld [vmem:[%s0 + $0xc8] sm:$0xff]
  %v41 = vld [vmem:[%s0 + $0xd0] sm:$0xff]
  %v42 = vld [vmem:[%s0 + $0xd8] sm:$0xff]
  %v43 = vld [vmem:[%s0 + $0xe0] sm:$0xff]
  %v44 = vld [vmem:[%s0 + $0xe8] sm:$0xff]
  %v45 = vld [vmem:[%s0 + $0xf0] sm:$0xff]
  %v46 = vld [vmem:[%s0 + $0xf8] sm:$0xff]
  %v47 = vpack.c.bf16 %v16, %v15
  %v48 = vpack.c.bf16 %v18, %v17
  %v49 = vpack.c.bf16 %v20, %v19
  %v50 = vpack.c.bf16 %v22, %v21
  %v51 = vpack.c.bf16 %v24, %v23
  %v52 = vpack.c.bf16 %v26, %v25
  %v53 = vpack.c.bf16 %v28, %v27
  %v54 = vpack.c.bf16 %v30, %v29
  %v55 = vpack.c.bf16 %v32, %v31
  %v56 = vpack.c.bf16 %v34, %v33
  %v57 = vpack.c.bf16 %v36, %v35
  %v58 = vpack.c.bf16 %v38, %v37
  %v59 = vpack.c.bf16 %v40, %v39
  %v60 = vpack.c.bf16 %v42, %v41
  %v61 = vpack.c.bf16 %v44, %v43
  %v62 = vpack.c.bf16 %v46, %v45
  %v63 = vld [vmem:[%s1] sm:$0x3]
  %v64 = vld [vmem:[%s2] sm:$0x1]
  %v66 = vlaneseq
  %v67 = vshrl.u32 %v66, 7
  %v68 = vsub.s32 0, %v67
  %v69 = vrot.slane %v64, %v68
  %vm71 = vcmask 23552
  %v73 = vsel %vm71, %v47, 0
  %v76 = vsel %vm71, %v48, 0
  %v79 = vsel %vm71, %v49, 0
  %v82 = vsel %vm71, %v50, 0
  %v85 = vsel %vm71, %v51, 0
  %v88 = vsel %vm71, %v52, 0
  %v91 = vsel %vm71, %v53, 0
  %v94 = vsel %vm71, %v54, 0
  %v97 = vsel %vm71, %v55, 0
  %v100 = vsel %vm71, %v56, 0
  %v103 = vsel %vm71, %v57, 0
  %v106 = vsel %vm71, %v58, 0
  %v109 = vsel %vm71, %v59, 0
  %v112 = vsel %vm71, %v60, 0
  %v115 = vsel %vm71, %v61, 0
  %v118 = vsel %vm71, %v62, 0
  %vm120 = vcmask 1040384
  %vm121 = vcmask 1041408
  %v122 = vsel %vm120, 4294967295, 65535
  %v123 = vsel %vm121, %v122, 0
  %v125 = vand.u32 %v63, %v123
  %127 = vmatprep.subr.bf16.mxu0 0
  %128 = vmatpush1.bf16.msra.mxu0 %v125
  %129 = vmatprep.subr.bf16.mxu0 0
  %130 = vmatpush1.bf16.msra.mxu0 0
  %131 = vmatprep.subr.bf16.mxu0 0
  %132 = vmatpush1.bf16.msra.mxu0 0
  %133 = vmatprep.subr.bf16.mxu0 0
  %134 = vmatpush1.bf16.msra.mxu0 0
  %135 = vmatprep.subr.bf16.mxu0 0
  %136 = vmatpush1.bf16.msra.mxu0 0
  %137 = vmatprep.subr.bf16.mxu0 0
  %138 = vmatpush1.bf16.msra.mxu0 0
  %139 = vmatprep.subr.bf16.mxu0 0
  %140 = vmatpush1.bf16.msra.mxu0 0
  %141 = vmatprep.subr.bf16.mxu0 0
  %142 = vmatpush1.bf16.msra.mxu0 0
  %143 = vmatprep.subr.bf16.mxu0 0
  %144 = vmatpush1.bf16.msra.mxu0 0
  %145 = vmatprep.subr.bf16.mxu0 0
  %146 = vmatpush1.bf16.msra.mxu0 0
  %147 = vmatprep.subr.bf16.mxu0 0
  %148 = vmatpush1.bf16.msra.mxu0 0
  %149 = vmatprep.subr.bf16.mxu0 0
  %150 = vmatpush1.bf16.msra.mxu0 0
  %151 = vmatprep.subr.bf16.mxu0 0
  %152 = vmatpush1.bf16.msra.mxu0 0
  %153 = vmatprep.subr.bf16.mxu0 0
  %154 = vmatpush1.bf16.msra.mxu0 0
  %155 = vmatprep.subr.bf16.mxu0 0
  %156 = vmatpush1.bf16.msra.mxu0 0
  %157 = vmatprep.subr.bf16.mxu0 0
  %158 = vmatpush1.bf16.msra.mxu0 0
  %159 = vmatprep.mubr.bf16.mxu0 0
  %160 = vmatmul.mubr.bf16.gmra.mrb[0].mxu0 %v73
  %v161 = vpop.f32.mrb[0].mxu0
  %v162 = vadd.f32 %v69, %v161
  %v163 = vpop.f32.mrb[0].mxu0
  %v164 = vpop.f32.mrb[0].mxu0
  %v165 = vadd.f32 %v69, %v164
  %v166 = vpop.f32.mrb[0].mxu0
  %167 = vmatprep.mubr.bf16.mxu0 0
  %168 = vmatmul.mubr.bf16.gmra.mrb[0].mxu0 %v76
  %v169 = vpop.f32.mrb[0].mxu0
  %v170 = vadd.f32 %v69, %v169
  %v171 = vpop.f32.mrb[0].mxu0
  %v172 = vpop.f32.mrb[0].mxu0
  %v173 = vadd.f32 %v69, %v172
  %v174 = vpop.f32.mrb[0].mxu0
  %175 = vmatprep.mubr.bf16.mxu0 0
  %176 = vmatmul.mubr.bf16.gmra.mrb[0].mxu0 %v79
  %v177 = vpop.f32.mrb[0].mxu0
  %v178 = vadd.f32 %v69, %v177
  %v179 = vpop.f32.mrb[0].mxu0
  %v180 = vpop.f32.mrb[0].mxu0
  %v181 = vadd.f32 %v69, %v180
  %v182 = vpop.f32.mrb[0].mxu0
  %183 = vmatprep.mubr.bf16.mxu0 0
  %184 = vmatmul.mubr.bf16.gmra.mrb[0].mxu0 %v82
  %v185 = vpop.f32.mrb[0].mxu0
  %v186 = vadd.f32 %v69, %v185
  %v187 = vpop.f32.mrb[0].mxu0
  %v188 = vpop.f32.mrb[0].mxu0
  %v189 = vadd.f32 %v69, %v188
  %v190 = vpop.f32.mrb[0].mxu0
  %191 = vmatprep.mubr.bf16.mxu0 0
  %192 = vmatmul.mubr.bf16.gmra.mrb[0].mxu0 %v85
  %v193 = vpop.f32.mrb[0].mxu0
  %v194 = vadd.f32 %v69, %v193
  %v195 = vpop.f32.mrb[0].mxu0
  %v196 = vpop.f32.mrb[0].mxu0
  %v197 = vadd.f32 %v69, %v196
  %v198 = vpop.f32.mrb[0].mxu0
  %199 = vmatprep.mubr.bf16.mxu0 0
  %200 = vmatmul.mubr.bf16.gmra.mrb[0].mxu0 %v88
  %v201 = vpop.f32.mrb[0].mxu0
  %v202 = vadd.f32 %v69, %v201
  %v203 = vpop.f32.mrb[0].mxu0
  %v204 = vpop.f32.mrb[0].mxu0
  %v205 = vadd.f32 %v69, %v204
  %v206 = vpop.f32.mrb[0].mxu0
  %207 = vmatprep.mubr.bf16.mxu0 0
  %208 = vmatmul.mubr.bf16.gmra.mrb[0].mxu0 %v91
  %v209 = vpop.f32.mrb[0].mxu0
  %v210 = vadd.f32 %v69, %v209
  %v211 = vpop.f32.mrb[0].mxu0
  %v212 = vpop.f32.mrb[0].mxu0
  %v213 = vadd.f32 %v69, %v212
  %v214 = vpop.f32.mrb[0].mxu0
  %215 = vmatprep.mubr.bf16.mxu0 0
  %216 = vmatmul.mubr.bf16.gmra.mrb[0].mxu0 %v94
  %v217 = vpop.f32.mrb[0].mxu0
  %v218 = vadd.f32 %v69, %v217
  %v219 = vpop.f32.mrb[0].mxu0
  %v220 = vpop.f32.mrb[0].mxu0
  %v221 = vadd.f32 %v69, %v220
  %v222 = vpop.f32.mrb[0].mxu0
  %223 = vmatprep.mubr.bf16.mxu0 0
  %224 = vmatmul.mubr.bf16.gmra.mrb[0].mxu0 %v97
  %v225 = vpop.f32.mrb[0].mxu0
  %v226 = vadd.f32 %v69, %v225
  %v227 = vpop.f32.mrb[0].mxu0
  %v228 = vpop.f32.mrb[0].mxu0
  %v229 = vadd.f32 %v69, %v228
  %v230 = vpop.f32.mrb[0].mxu0
  %231 = vmatprep.mubr.bf16.mxu0 0
  %232 = vmatmul.mubr.bf16.gmra.mrb[0].mxu0 %v100
  %v233 = vpop.f32.mrb[0].mxu0
  %v234 = vadd.f32 %v69, %v233
  %v235 = vpop.f32.mrb[0].mxu0
  %v236 = vpop.f32.mrb[0].mxu0
  %v237 = vadd.f32 %v69, %v236
  %v238 = vpop.f32.mrb[0].mxu0
  %239 = vmatprep.mubr.bf16.mxu0 0
  %240 = vmatmul.mubr.bf16.gmra.mrb[0].mxu0 %v103
  %v241 = vpop.f32.mrb[0].mxu0
  %v242 = vadd.f32 %v69, %v241
  %v243 = vpop.f32.mrb[0].mxu0
  %v244 = vpop.f32.mrb[0].mxu0
  %v245 = vadd.f32 %v69, %v244
  %v246 = vpop.f32.mrb[0].mxu0
  %247 = vmatprep.mubr.bf16.mxu0 0
  %248 = vmatmul.mubr.bf16.gmra.mrb[0].mxu0 %v106
  %v249 = vpop.f32.mrb[0].mxu0
  %v250 = vadd.f32 %v69, %v249
  %v251 = vpop.f32.mrb[0].mxu0
  %v252 = vpop.f32.mrb[0].mxu0
  %v253 = vadd.f32 %v69, %v252
  %v254 = vpop.f32.mrb[0].mxu0
  %255 = vmatprep.mubr.bf16.mxu0 0
  %256 = vmatmul.mubr.bf16.gmra.mrb[0].mxu0 %v109
  %v257 = vpop.f32.mrb[0].mxu0
  %v258 = vadd.f32 %v69, %v257
  %v259 = vpop.f32.mrb[0].mxu0
  %v260 = vpop.f32.mrb[0].mxu0
  %v261 = vadd.f32 %v69, %v260
  %v262 = vpop.f32.mrb[0].mxu0
  %263 = vmatprep.mubr.bf16.mxu0 0
  %264 = vmatmul.mubr.bf16.gmra.mrb[0].mxu0 %v112
  %v265 = vpop.f32.mrb[0].mxu0
  %v266 = vadd.f32 %v69, %v265
  %v267 = vpop.f32.mrb[0].mxu0
  %v268 = vpop.f32.mrb[0].mxu0
  %v269 = vadd.f32 %v69, %v268
  %v270 = vpop.f32.mrb[0].mxu0
  %271 = vmatprep.mubr.bf16.mxu0 0
  %272 = vmatmul.mubr.bf16.gmra.mrb[0].mxu0 %v115
  %v273 = vpop.f32.mrb[0].mxu0
  %v274 = vadd.f32 %v69, %v273
  %v275 = vpop.f32.mrb[0].mxu0
  %v276 = vpop.f32.mrb[0].mxu0
  %v277 = vadd.f32 %v69, %v276
  %v278 = vpop.f32.mrb[0].mxu0
  %279 = vmatprep.mubr.bf16.mxu0 0
  %280 = vmatmul.mubr.bf16.gmra.mrb[0].mxu0 %v118
  %v281 = vpop.f32.mrb[0].mxu0
  %v282 = vadd.f32 %v69, %v281
  %v283 = vpop.f32.mrb[0].mxu0
  %v284 = vpop.f32.mrb[0].mxu0
  %v285 = vadd.f32 %v69, %v284
  %v286 = vpop.f32.mrb[0].mxu0
  %287 = vdwg.mxu0
  %v288 = vmax.f32 %v162, 0.0
  %v289 = vmax.f32 %v165, 0.0
  %v290 = vmax.f32 %v170, 0.0
  %v291 = vmax.f32 %v173, 0.0
  %v292 = vmax.f32 %v178, 0.0
  %v293 = vmax.f32 %v181, 0.0
  %v294 = vmax.f32 %v186, 0.0
  %v295 = vmax.f32 %v189, 0.0
  %v296 = vmax.f32 %v194, 0.0
  %v297 = vmax.f32 %v197, 0.0
  %v298 = vmax.f32 %v202, 0.0
  %v299 = vmax.f32 %v205, 0.0
  %v300 = vmax.f32 %v210, 0.0
  %v301 = vmax.f32 %v213, 0.0
  %v302 = vmax.f32 %v218, 0.0
  %v303 = vmax.f32 %v221, 0.0
  %v304 = vmax.f32 %v226, 0.0
  %v305 = vmax.f32 %v229, 0.0
  %v306 = vmax.f32 %v234, 0.0
  %v307 = vmax.f32 %v237, 0.0
  %v308 = vmax.f32 %v242, 0.0
  %v309 = vmax.f32 %v245, 0.0
  %v310 = vmax.f32 %v250, 0.0
  %v311 = vmax.f32 %v253, 0.0
  %v312 = vmax.f32 %v258, 0.0
  %v313 = vmax.f32 %v261, 0.0
  %v314 = vmax.f32 %v266, 0.0
  %v315 = vmax.f32 %v269, 0.0
  %v316 = vmax.f32 %v274, 0.0
  %v317 = vmax.f32 %v277, 0.0
  %v318 = vmax.f32 %v282, 0.0
  %v319 = vmax.f32 %v285, 0.0
  %vm320 = vcmask 130048
  %321 = vst.msk [vmem:[%s3] sm:$0xff] %vm320, %v288
  %322 = vst.msk [vmem:[%s3 + $0x8] sm:$0xff] %vm320, %v289
  %323 = vst.msk [vmem:[%s3 + $0x10] sm:$0xff] %vm320, %v290
  %324 = vst.msk [vmem:[%s3 + $0x18] sm:$0xff] %vm320, %v291
  %325 = vst.msk [vmem:[%s3 + $0x20] sm:$0xff] %vm320, %v292
  %326 = vst.msk [vmem:[%s3 + $0x28] sm:$0xff] %vm320, %v293
  %327 = vst.msk [vmem:[%s3 + $0x30] sm:$0xff] %vm320, %v294
  %328 = vst.msk [vmem:[%s3 + $0x38] sm:$0xff] %vm320, %v295
  %329 = vst.msk [vmem:[%s3 + $0x40] sm:$0xff] %vm320, %v296
  %330 = vst.msk [vmem:[%s3 + $0x48] sm:$0xff] %vm320, %v297
  %331 = vst.msk [vmem:[%s3 + $0x50] sm:$0xff] %vm320, %v298
  %332 = vst.msk [vmem:[%s3 + $0x58] sm:$0xff] %vm320, %v299
  %333 = vst.msk [vmem:[%s3 + $0x60] sm:$0xff] %vm320, %v300
  %334 = vst.msk [vmem:[%s3 + $0x68] sm:$0xff] %vm320, %v301
  %335 = vst.msk [vmem:[%s3 + $0x70] sm:$0xff] %vm320, %v302
  %336 = vst.msk [vmem:[%s3 + $0x78] sm:$0xff] %vm320, %v303
  %337 = vst.msk [vmem:[%s3 + $0x80] sm:$0xff] %vm320, %v304
  %338 = vst.msk [vmem:[%s3 + $0x88] sm:$0xff] %vm320, %v305
  %339 = vst.msk [vmem:[%s3 + $0x90] sm:$0xff] %vm320, %v306
  %340 = vst.msk [vmem:[%s3 + $0x98] sm:$0xff] %vm320, %v307
  %341 = vst.msk [vmem:[%s3 + $0xa0] sm:$0xff] %vm320, %v308
  %342 = vst.msk [vmem:[%s3 + $0xa8] sm:$0xff] %vm320, %v309
  %343 = vst.msk [vmem:[%s3 + $0xb0] sm:$0xff] %vm320, %v310
  %344 = vst.msk [vmem:[%s3 + $0xb8] sm:$0xff] %vm320, %v311
  %345 = vst.msk [vmem:[%s3 + $0xc0] sm:$0xff] %vm320, %v312
  %346 = vst.msk [vmem:[%s3 + $0xc8] sm:$0xff] %vm320, %v313
  %347 = vst.msk [vmem:[%s3 + $0xd0] sm:$0xff] %vm320, %v314
  %348 = vst.msk [vmem:[%s3 + $0xd8] sm:$0xff] %vm320, %v315
  %349 = vst.msk [vmem:[%s3 + $0xe0] sm:$0xff] %vm320, %v316
  %350 = vst.msk [vmem:[%s3 + $0xe8] sm:$0xff] %vm320, %v317
  %351 = vst.msk [vmem:[%s3 + $0xf0] sm:$0xff] %vm320, %v318
  %352 = vst.msk [vmem:[%s3 + $0xf8] sm:$0xff] %vm320, %v319
  // Predicated region
  $region14: #{tpu_custom_call.1} parent=0 // pred_check
    _
  $region15: #{tpu_custom_call.1} parent=0 // pred_check_branch
    %354 = sbr.rel (0) target = $region17
  $region16: #{tpu_custom_call.1} parent=0 // pred_region
    _
  $region17: #{tpu_custom_call.1} parent=0 // pred_fallthru
    _
  // Predicated region
  $region18: #{tpu_custom_call.1} parent=0 // pred_check
    _
  $region19: #{tpu_custom_call.1} parent=0 // pred_check_branch
    %356 = sbr.rel (0) target = $region21
  $region20: #{tpu_custom_call.1} parent=0 // pred_region
    _
  $region21: #{tpu_custom_call.1} parent=0 // pred_fallthru
    _

</llo_original>
